<compile_context>
chip_gen: v7x
topology: tpu7x:2x2x1
jax: 0.10.0
libtpu: 0.0.40
codegen_flags: <defaults>
</compile_context>

<pallas_src>
import functools

import jax
import jax.numpy as jnp
from jax.experimental import pallas as pl
from jax.experimental.pallas import tpu as pltpu


def _round_up(n, m):
    return ((n + m - 1) // m) * m


# ----------------------------------------------------------------------------
# Pallas kernel: one grid step = (batch tile b, layer l).
# ----------------------------------------------------------------------------
def _sequential_composer_kernel(x_ref, w_ref, b_ref, o_ref, h_ref):
    """x_ref: (TB, Dp) f32      w_ref: (1, Dp, Dp) bf16, (in, out) layout
       b_ref: (1, 1, Dp) f32    o_ref: (TB, Dp) f32
       h_ref: (TB, Dp) f32 VMEM scratch (running activation)."""
    l = pl.program_id(1)
    num_layers = pl.num_programs(1)

    # First layer for this batch tile: seed the running activation with x.
    @pl.when(l == 0)
    def _():
        h_ref[...] = x_ref[...]

    w = w_ref[0]                                          # (Dp, Dp) bf16
    # bf16 operands on the MXU, f32 accumulation.
    y = jnp.dot(h_ref[...].astype(w.dtype), w,
                preferred_element_type=jnp.float32)
    y = y + b_ref[0]                                      # (1, Dp) broadcast

    # ReLU feeds the next layer; the last layer's logits skip the activation.
    h_ref[...] = jnp.maximum(y, 0.0)

    @pl.when(l == num_layers - 1)
    def _():
        o_ref[...] = y.astype(o_ref.dtype)                # single wide store


# ----------------------------------------------------------------------------
# Parameter preparation (hoisted out of forward): transpose, stack, pad, cast.
# ----------------------------------------------------------------------------
def prepare_params(module_list):
    """module_list: list of {"weight": (out, in), "bias": (out,)} (torch layout).
    Returns (Ws, bs, d_out_last) with Ws: (L, Dp, Dp) bf16 in (in, out) layout,
    bs: (L, 1, Dp) f32, padded to a common 128-multiple feature width."""
    L = len(module_list)
    dims_in = [int(m["weight"].shape[1]) for m in module_list]
    dims_out = [int(m["weight"].shape[0]) for m in module_list]
    d_pad = _round_up(max(dims_in + dims_out + [128]), 128)

    Ws = jnp.zeros((L, d_pad, d_pad), jnp.bfloat16)
    bs = jnp.zeros((L, 1, d_pad), jnp.float32)
    for l, m in enumerate(module_list):
        w_t = jnp.asarray(m["weight"]).T                  # (in, out)
        b = jnp.asarray(m["bias"])
        Ws = Ws.at[l, : w_t.shape[0], : w_t.shape[1]].set(w_t.astype(jnp.bfloat16))
        bs = bs.at[l, 0, : b.shape[0]].set(b.astype(jnp.float32))
    return Ws, bs, dims_out[-1]


# ----------------------------------------------------------------------------
# Wrapper: pad x, run the layer-streaming kernel, slice the valid region.
# ----------------------------------------------------------------------------
@functools.partial(jax.jit, static_argnames=("d_out", "batch_tile"))
def sequential_compose(x, stacked_w, stacked_b, *, d_out=None, batch_tile=128):
    """x: (B, d_in) f32; stacked_w: (L, Dp, Dp) bf16; stacked_b: (L, 1, Dp) f32."""
    B, d_in = x.shape
    L, d_pad, _ = stacked_w.shape
    d_out = d_pad if d_out is None else d_out

    TB = min(batch_tile, max(8, _round_up(B, 8)))
    B_pad = _round_up(B, TB)

    xp = jnp.zeros((B_pad, d_pad), jnp.float32)
    xp = xp.at[:B, :d_in].set(x.astype(jnp.float32))

    # VMEM budget: double-buffered bf16 weight + bias tiles, x/out buffers,
    # plus the f32 activation scratch (kept well under the v7x 64 MiB cap).
    est = (2 * d_pad * d_pad * 2 + 2 * d_pad * 4
           + 4 * TB * d_pad * 4 + TB * d_pad * 4)
    vmem_limit = min(max(est * 3 // 2, 16 * 1024 * 1024), 32 * 1024 * 1024)

    out_p = pl.pallas_call(
        _sequential_composer_kernel,
        out_shape=jax.ShapeDtypeStruct((B_pad, d_pad), jnp.float32),
        grid_spec=pltpu.PrefetchScalarGridSpec(
            num_scalar_prefetch=0,
            grid=(B_pad // TB, L),                       # layer axis innermost
            in_specs=[
                pl.BlockSpec((TB, d_pad), lambda b, l: (b, 0)),      # x (resident over l)
                pl.BlockSpec((1, d_pad, d_pad), lambda b, l: (l, 0, 0)),  # per-layer W
                pl.BlockSpec((1, 1, d_pad), lambda b, l: (l, 0, 0)),      # per-layer bias
            ],
            out_specs=pl.BlockSpec((TB, d_pad), lambda b, l: (b, 0)),
            scratch_shapes=[pltpu.VMEM((TB, d_pad), jnp.float32)],
        ),
        compiler_params=pltpu.CompilerParams(
            dimension_semantics=("parallel", "arbitrary"),
            vmem_limit_bytes=vmem_limit,
        ),
    )(xp, stacked_w, stacked_b)

    return out_p[:B, :d_out]


# ----------------------------------------------------------------------------
# JAX-side Composer mirroring the PyTorch API.
# ----------------------------------------------------------------------------
class Composer:
    """Composes multiple (Linear) modules into a single net (sequential)."""

    def __init__(self, composer, module_list, loss_fn=None, structure=None,
                 instructions=None):
        # module_list: list of dicts {"weight": (out,in), "bias": (out,)}
        self.module_list = module_list
        self.num_modules = len(module_list)
        self.composer = composer
        self.loss_fn = loss_fn
        self.structure = structure or {}
        self.instructions = instructions or {}
        # Hoisted out of forward(): transpose + stack + pad + bf16 cast once.
        self._prepared = prepare_params(module_list)

    def prepare_weights(self, weights):
        """Pre-prepare a MAML-style fast-weight set for repeated use."""
        return prepare_params(weights)

    def forward_no_weights(self, x, J=None, mini_batch_size=None, iter=None,
                           i_batch=None):
        # J / mini_batch_size / iter / i_batch are bookkeeping-only here.
        Ws, bs, d_out = self._prepared
        return sequential_compose(x, Ws, bs, d_out=d_out)

    def forward_with_weights(self, x, weights):
        # `weights` may be a raw module list or an already-prepared tuple.
        if isinstance(weights, tuple) and len(weights) == 3:
            Ws, bs, d_out = weights
        else:
            Ws, bs, d_out = prepare_params(weights)
        return sequential_compose(x, Ws, bs, d_out=d_out)

    def forward(self, x, J, weights=None, mini_batch_size=None, iter=None,
                i_batch=None):
        if weights is None:
            return self.forward_no_weights(x, J, mini_batch_size, iter, i_batch)
        else:
            return self.forward_with_weights(x, weights)

    def net_forward(self, x, weights=None):
        return self.forward(x, None, weights)

    # TODO(synk): copy_weights raises NotImplementedError in the reference and
    # mutates torch Parameters in-place; no Pallas equivalent — omitted.


# ----------------------------------------------------------------------------
# Pure-JAX f32 reference (for sanity checking the kernel).
# ----------------------------------------------------------------------------
def _ref_forward(x, module_list):
    h = x
    L = len(module_list)
    for l, m in enumerate(module_list):
        h = h @ m["weight"].T + m["bias"]
        if l < L - 1:
            h = jnp.maximum(h, 0.0)
    return h


if __name__ == "__main__":
    key = jax.random.PRNGKey(0)
    B, D, L = 8, 32, 3  # batch, hidden width, number of composed modules

    # Deterministic parameter init (synthetic, no checkpoint loading).
    module_list = []
    k = key
    for _ in range(L):
        k, kw, kb = jax.random.split(k, 3)
        module_list.append({
            "weight": (jax.random.normal(kw, (D, D), jnp.float32)
                       / jnp.sqrt(D)),                      # torch (out, in)
            "bias": jax.random.normal(kb, (D,), jnp.float32) * 0.1,
        })

    k, kx = jax.random.split(k)
    x = jax.random.normal(kx, (B, D), jnp.float32)
    J = None  # unused bookkeeping argument, matching the reference signature

    net = Composer("sequential", module_list)

    # forward_no_weights path
    out = net.forward(x, J)
    out = jax.block_until_ready(out)

    # forward_with_weights path (substitute fast-weights = same params here)
    out_w = net.forward(x, J, weights=module_list)
    out_w = jax.block_until_ready(out_w)

    ref = _ref_forward(x, module_list)
    assert out.shape == (B, D)
    assert out_w.shape == (B, D)
    # bf16 MXU operands with f32 accumulation -> loosened tolerance vs f32 ref.
    assert jnp.allclose(out, ref, atol=5e-2, rtol=5e-2)
    assert jnp.allclose(out_w, ref, atol=5e-2, rtol=5e-2)

    print("KERNEL_OK")
</pallas_src>

<mosaic_0001>
module attributes {stable_mosaic.version = 11 : i64} {
  func.func @_sequential_composer_kernel(%arg0: i32, %arg1: i32, %arg2: memref<8x128xf32, #tpu.memory_space<vmem>>, %arg3: memref<1x128x128xbf16, #tpu.memory_space<vmem>>, %arg4: memref<1x1x128xf32, #tpu.memory_space<vmem>>, %arg5: memref<8x128xf32, #tpu.memory_space<vmem>>, %arg6: memref<8x128xf32, #tpu.memory_space<vmem>>) attributes {dimension_semantics = [#tpu.dimension_semantics<parallel>, #tpu.dimension_semantics<arbitrary>], iteration_bounds = array<i64: 1, 3>, scalar_prefetch = 0 : i64, scratch_operands = 1 : i64, tpu.core_type = #tpu.core_type<tc>, window_params = [{transform_indices = @transform_0, window_bounds = array<i64: 8, 128>}, {transform_indices = @transform_1, window_bounds = array<i64: 1, 128, 128>}, {transform_indices = @transform_2, window_bounds = array<i64: 1, 1, 128>}, {transform_indices = @transform_3, window_bounds = array<i64: 8, 128>}]} {
    %c0_i32 = arith.constant 0 : i32
    %0 = arith.cmpi eq, %arg1, %c0_i32 : i32
    %1 = arith.extui %0 : i1 to i32
    %c0_i32_0 = arith.constant 0 : i32
    %2 = arith.cmpi ne, %1, %c0_i32_0 : i32
    scf.if %2 {
      %c0_12 = arith.constant 0 : index
      %c0_13 = arith.constant 0 : index
      %18 = vector.load %arg2[%c0_12, %c0_13] : memref<8x128xf32, #tpu.memory_space<vmem>>, vector<8x128xf32>
      %c0_14 = arith.constant 0 : index
      %c0_15 = arith.constant 0 : index
      %19 = vector.load %arg6[%c0_14, %c0_15] : memref<8x128xf32, #tpu.memory_space<vmem>>, vector<8x128xf32>
      tpu.vector_store %arg6[%c0_14, %c0_15], %18 {strides = array<i32>} : memref<8x128xf32, #tpu.memory_space<vmem>>, vector<8x128xf32>,
    } else {
    }
    %c0 = arith.constant 0 : index
    %c0_1 = arith.constant 0 : index
    %c0_2 = arith.constant 0 : index
    %3 = vector.load %arg3[%c0, %c0_1, %c0_2] : memref<1x128x128xbf16, #tpu.memory_space<vmem>>, vector<1x128x128xbf16>
    %4 = vector.shape_cast %3 : vector<1x128x128xbf16> to vector<128x128xbf16>
    %c0_3 = arith.constant 0 : index
    %c0_4 = arith.constant 0 : index
    %5 = vector.load %arg6[%c0_3, %c0_4] : memref<8x128xf32, #tpu.memory_space<vmem>>, vector<8x128xf32>
    %6 = arith.truncf %5 : vector<8x128xf32> to vector<8x128xbf16>
    %cst = arith.constant dense<0.000000e+00> : vector<8x128xf32>
    %7 = tpu.matmul %6, %4, %cst {dimension_numbers = #tpu.dot_dimension_numbers<[1], [0], [0], [1], [0, 0, 1, 1], [], []>} : vector<8x128xbf16>, vector<128x128xbf16>, vector<8x128xf32> -> vector<8x128xf32>
    %c0_5 = arith.constant 0 : index
    %c0_6 = arith.constant 0 : index
    %c0_7 = arith.constant 0 : index
    %8 = vector.load %arg4[%c0_5, %c0_6, %c0_7] : memref<1x1x128xf32, #tpu.memory_space<vmem>>, vector<1x1x128xf32>
    %9 = vector.shape_cast %8 : vector<1x1x128xf32> to vector<1x128xf32>
    %10 = vector.broadcast %9 : vector<1x128xf32> to vector<8x128xf32>
    %11 = arith.addf %7, %10 : vector<8x128xf32>
    %cst_8 = arith.constant 0.000000e+00 : f32
    %12 = vector.broadcast %cst_8 : f32 to vector<8x128xf32>
    %13 = arith.maximumf %11, %12 : vector<8x128xf32>
    %c0_9 = arith.constant 0 : index
    %c0_10 = arith.constant 0 : index
    %14 = vector.load %arg6[%c0_9, %c0_10] : memref<8x128xf32, #tpu.memory_space<vmem>>, vector<8x128xf32>
    tpu.vector_store %arg6[%c0_9, %c0_10], %13 {strides = array<i32>} : memref<8x128xf32, #tpu.memory_space<vmem>>, vector<8x128xf32>,
    %c2_i32 = arith.constant 2 : i32
    %15 = arith.cmpi eq, %arg1, %c2_i32 : i32
    %16 = arith.extui %15 : i1 to i32
    %c0_i32_11 = arith.constant 0 : i32
    %17 = arith.cmpi ne, %16, %c0_i32_11 : i32
    scf.if %17 {
      %c0_12 = arith.constant 0 : index
      %c0_13 = arith.constant 0 : index
      %18 = vector.load %arg5[%c0_12, %c0_13] : memref<8x128xf32, #tpu.memory_space<vmem>>, vector<8x128xf32>
      tpu.vector_store %arg5[%c0_12, %c0_13], %11 {strides = array<i32>} : memref<8x128xf32, #tpu.memory_space<vmem>>, vector<8x128xf32>,
    } else {
    }
    return
  }
  func.func @transform_0(%arg0: i32, %arg1: i32) -> (i32, i32) {
    %c0_i32 = arith.constant 0 : i32
    %c0_i32_0 = arith.constant 0 : i32
    return %arg0, %c0_i32 : i32, i32
  }
  func.func @transform_1(%arg0: i32, %arg1: i32) -> (i32, i32, i32) {
    %c0_i32 = arith.constant 0 : i32
    %c0_i32_0 = arith.constant 0 : i32
    %c0_i32_1 = arith.constant 0 : i32
    return %arg1, %c0_i32, %c0_i32_0 : i32, i32, i32
  }
  func.func @transform_2(%arg0: i32, %arg1: i32) -> (i32, i32, i32) {
    %c0_i32 = arith.constant 0 : i32
    %c0_i32_0 = arith.constant 0 : i32
    %c0_i32_1 = arith.constant 0 : i32
    return %arg1, %c0_i32, %c0_i32_0 : i32, i32, i32
  }
  func.func @transform_3(%arg0: i32, %arg1: i32) -> (i32, i32) {
    %c0_i32 = arith.constant 0 : i32
    %c0_i32_0 = arith.constant 0 : i32
    return %arg0, %c0_i32 : i32, i32
  }
}

</mosaic_0001>

<llo_original>
// kernel: sequential_compose.1
$region0: #{sequential_compose.1}
  #allocation0 [shape = 'u32[]', space=smem, size = 0x4, offset = 0x4, fixed_abs, tag = 'smem constant byte address 0x4 - core index']
  #allocation1 [shape = 'u32[144,128]{1,0:T(1,128)}', space=vmem, size = 0x12000, scoped, tag = 'internal scratch']
  #allocation2 [shape = 'f32[8,128]{1,0:T(8,128)}', space=vmem, size = 0x1000, scoped, tag = 'scratch operand']
  %s0 = inlined_call_operand.vmem [shape: f32[8,128], index: 0, kind: input, shape index: {}]
  %s1 = inlined_call_operand.hbm [shape: bf16[3,128,128], index: 1, kind: input, shape index: {}]
  %s2 = inlined_call_operand.vmem [shape: f32[3,1,128], index: 2, kind: input, shape index: {}]
  %s3 = inlined_call_operand.hbm [shape: f32[8,128], index: 3, kind: output, shape index: {}]
  %s4 = sld [smem:[#allocation0]]
  $region57: #{sequential_compose.1} parent=0
    _
  %s6 = ssub.s32 1, %s4
  %s7 = scalar_select 0, %s6, %s4
  $region1: #{sequential_compose.1} parent=0
    #allocation3 [shape = 'u8[65536]{0}', space=vmem, size = 0x10000, scoped, tag = 'input window, operand 1']
    #allocation4 [shape = 's32[2]{0}', space=sflag, size = 0x8, scoped, tag = 'scoped memory for sequential_compose.1']
    #allocation5 [shape = 's32[2]{0}', space=sflag, size = 0x8, scoped, tag = 'scoped memory for sequential_compose.1']
    #allocation6 [shape = 'u8[4096]{0}', space=vmem, size = 0x1000, scoped, tag = 'output window, operand 0, single buffered']
    %8 = vsyncpa [#allocation4], 0
    %s9 = scalar_lea.sflag [#allocation4], 1
    %10 = vsyncpa %s9, 0
    %11 = vsyncpa [#allocation5], 0
    loop: start=0, step=1, limit=5
    $region2: #{sequential_compose.1} parent=1 // loop_pre_header
      _
    $region3: #{sequential_compose.1} parent=1 // loop_header
      %s13 = sphi 0, %s17
      %p14 = scmp.ge.s32.totalorder %s13, 5
      %s20 = sphi 0, %s32
      %s21 = sphi 0, %s28
      %s22 = sphi 0, %s20
      %s23 = sphi 0, %s21
      %s24 = sphi 0, %s22
      %s25 = sphi 0, %s23
      %s35 = sphi 0, %s37
      %s38 = sphi 0, %s35
      %s39 = sphi 0, %s38
      %s55 = sphi 0, %s39
      %s61 = sphi 0, %s63
      %s64 = sphi 0, %s61
      %s65 = sphi 0, %s64
      %s81 = sphi 0, %s65
      %s87 = sphi 0, %s89
      %s90 = sphi 0, %s87
      %s91 = sphi 0, %s90
      %s107 = sphi 0, %s91
      %s113 = sphi 0, %s115
      %s116 = sphi 0, %s113
      %s117 = sphi 0, %s116
      %s133 = sphi 0, %s117
    $region4: #{sequential_compose.1} parent=1 // loop_header_branch
      %16 = sbr.rel (%p14) target = $region8
    $region5: #{sequential_compose.1} parent=1 // loop_body
      %s18 = ssub.s32 %s13, 1
      %s19 = ssub.s32 %s13, 2
      %s26 = sadd.s32 1, %s21
      %p27 = scmp.ge.s32.totalorder %s26, 3
      %s28 = scalar_select %p27, 0, %s26
      %s29 = sadd.s32 1, %s20
      %s30 = scalar_select %p27, %s29, %s20
      %p31 = scmp.ge.s32.totalorder %s30, 1
      %s32 = scalar_select %p31, 0, %s30
      %s33 = ssub.s32 %s20, %s32
      %p34 = scmp.eq.s32.totalorder %s33, 0
      %s36 = sadd.s32 %s35, 1
      %s37 = scalar_select %p34, %s35, %s36
      %p40 = pneg %p34
      %p41 = scmp.eq.s32.totalorder %s13, 2
      %p42 = por %p40, %p41
      %p43 = scmp.ne.s32.totalorder %s35, %s38
      %p44 = scmp.eq.s32.totalorder %s13, 0
      %p45 = por %p43, %p44
      %p46 = scmp.ne.s32.totalorder %s35, %s38
      %p47 = scmp.eq.s32.totalorder %s18, 2
      %p48 = por %p46, %p47
      %p49 = scmp.ne.s32.totalorder %s38, %s39
      %p50 = scmp.eq.s32.totalorder %s18, 0
      %p51 = por %p49, %p50
      %p52 = scmp.ne.s32.totalorder %s38, %s39
      %p53 = scmp.eq.s32.totalorder %s19, 2
      %p54 = por %p52, %p53
      %p56 = scmp.ne.s32.totalorder %s39, %s55
      %p57 = scmp.eq.s32.totalorder %s19, 0
      %p58 = por %p56, %p57
      %s59 = ssub.s32 %s21, %s28
      %p60 = scmp.eq.s32.totalorder %s59, 0
      %s62 = sadd.s32 %s61, 1
      %s63 = scalar_select %p60, %s61, %s62
      %p66 = pneg %p60
      %p67 = scmp.eq.s32.totalorder %s13, 2
      %p68 = por %p66, %p67
      %p69 = scmp.ne.s32.totalorder %s61, %s64
      %p70 = scmp.eq.s32.totalorder %s13, 0
      %p71 = por %p69, %p70
      %p72 = scmp.ne.s32.totalorder %s61, %s64
      %p73 = scmp.eq.s32.totalorder %s18, 2
      %p74 = por %p72, %p73
      %p75 = scmp.ne.s32.totalorder %s64, %s65
      %p76 = scmp.eq.s32.totalorder %s18, 0
      %p77 = por %p75, %p76
      %p78 = scmp.ne.s32.totalorder %s64, %s65
      %p79 = scmp.eq.s32.totalorder %s19, 2
      %p80 = por %p78, %p79
      %p82 = scmp.ne.s32.totalorder %s65, %s81
      %p83 = scmp.eq.s32.totalorder %s19, 0
      %p84 = por %p82, %p83
      %s85 = ssub.s32 %s21, %s28
      %p86 = scmp.eq.s32.totalorder %s85, 0
      %s88 = sadd.s32 %s87, 1
      %s89 = scalar_select %p86, %s87, %s88
      %p92 = pneg %p86
      %p93 = scmp.eq.s32.totalorder %s13, 2
      %p94 = por %p92, %p93
      %p95 = scmp.ne.s32.totalorder %s87, %s90
      %p96 = scmp.eq.s32.totalorder %s13, 0
      %p97 = por %p95, %p96
      %p98 = scmp.ne.s32.totalorder %s87, %s90
      %p99 = scmp.eq.s32.totalorder %s18, 2
      %p100 = por %p98, %p99
      %p101 = scmp.ne.s32.totalorder %s90, %s91
      %p102 = scmp.eq.s32.totalorder %s18, 0
      %p103 = por %p101, %p102
      %p104 = scmp.ne.s32.totalorder %s90, %s91
      %p105 = scmp.eq.s32.totalorder %s19, 2
      %p106 = por %p104, %p105
      %p108 = scmp.ne.s32.totalorder %s91, %s107
      %p109 = scmp.eq.s32.totalorder %s19, 0
      %p110 = por %p108, %p109
      %s111 = ssub.s32 %s20, %s32
      %p112 = scmp.eq.s32.totalorder %s111, 0
      %s114 = sadd.s32 %s113, 1
      %s115 = scalar_select %p112, %s113, %s114
      %p118 = pneg %p112
      %p119 = scmp.eq.s32.totalorder %s13, 2
      %p120 = por %p118, %p119
      %p121 = scmp.ne.s32.totalorder %s113, %s116
      %p122 = scmp.eq.s32.totalorder %s13, 0
      %p123 = por %p121, %p122
      %p124 = scmp.ne.s32.totalorder %s113, %s116
      %p125 = scmp.eq.s32.totalorder %s18, 2
      %p126 = por %p124, %p125
      %p127 = scmp.ne.s32.totalorder %s116, %s117
      %p128 = scmp.eq.s32.totalorder %s18, 0
      %p129 = por %p127, %p128
      %p130 = scmp.ne.s32.totalorder %s116, %s117
      %p131 = scmp.eq.s32.totalorder %s19, 2
      %p132 = por %p130, %p131
      %p134 = scmp.ne.s32.totalorder %s117, %s133
      %p135 = scmp.eq.s32.totalorder %s19, 0
      %p136 = por %p134, %p135
      %p137 = scmp.le.s32.totalorder 1, %s13
      %p138 = scmp.lt.s32.totalorder %s13, 4
      %p139 = pnand %p137, %p138
      %p140 = pneg %p139
      // Predicated region
      $region9: #{sequential_compose.1} parent=5 // pred_check
        _
      $region10: #{sequential_compose.1} parent=5 // pred_check_branch
        %142 = sbr.rel (%p139) target = $region12
      $region11: #{sequential_compose.1} parent=5 // pred_region
        %s143 = ssub.s32 %s13, 1
        // Predicated region
        $region13: #{sequential_compose.1} parent=11 // pred_check
          %p144 = pneg %p51
        $region14: #{sequential_compose.1} parent=11 // pred_check_branch
          %146 = sbr.rel (%p144) target = $region16
        $region15: #{sequential_compose.1} parent=11 // pred_region
          %p147 = scmp.lt.s32.totalorder %s22, 0
          %s148 = scalar_select %p147, %s22, 0
          %s149 = smul.addr %s148, 8
          %s150 = scalar_lea.vmem %s0, %s149
        $region16: #{sequential_compose.1} parent=11 // pred_fallthru
          _
      $region12: #{sequential_compose.1} parent=5 // pred_fallthru
        _
      %p151 = scmp.lt.s32.totalorder %s13, 3
      // Predicated region
      $region17: #{sequential_compose.1} parent=5 // pred_check
        %p152 = pneg %p151
      $region18: #{sequential_compose.1} parent=5 // pred_check_branch
        %154 = sbr.rel (%p152) target = $region20
      $region19: #{sequential_compose.1} parent=5 // pred_region
        // Predicated region
        $region21: #{sequential_compose.1} parent=19 // pred_check
          %p155 = pneg %p71
        $region22: #{sequential_compose.1} parent=19 // pred_check_branch
          %157 = sbr.rel (%p155) target = $region24
        $region23: #{sequential_compose.1} parent=19 // pred_region
          %s158 = sand.u32 %s61, 1
          %s159 = scalar_lea.sflag [#allocation4], %s158
          %s160 = sand.u32 %s61, 1
          %s161 = smul.addr %s160, 64
          %s162 = scalar_lea.vmem [#allocation3], %s161
          %s164 = ssub.s32 1024, 1024
          %165 = vsyncadd %s159, %s164
          %s166 = smul.addr %s21, 16
          %s167 = smul.addr %s166, 64
          %s168 = scalar_lea.hbm %s1, %s167
          %s169 = sshll.u32 %s162, 4
          %s170 = int_to_ptr.vmem [resolvable:$true] %s169
          %175 = dma.hbm_to_vmem [thread:$0]  %s168, 1024, %s170, %s159, 64, 64, 4
        $region24: #{sequential_compose.1} parent=19 // pred_fallthru
          _
        // Predicated region
        $region25: #{sequential_compose.1} parent=19 // pred_check
          %p176 = pneg %p97
        $region26: #{sequential_compose.1} parent=19 // pred_check_branch
          %178 = sbr.rel (%p176) target = $region28
        $region27: #{sequential_compose.1} parent=19 // pred_region
          %p179 = scmp.lt.s32.totalorder %s21, 2
          %s180 = scalar_select %p179, %s21, 2
          %s181 = scalar_lea.vmem %s2, %s180
        $region28: #{sequential_compose.1} parent=19 // pred_fallthru
          _
      $region20: #{sequential_compose.1} parent=5 // pred_fallthru
        _
      %p182 = scmp.le.s32.totalorder 1, %s13
      %p183 = scmp.lt.s32.totalorder %s13, 4
      %p184 = pnand %p182, %p183
      %p185 = pneg %p184
      // Predicated region
      $region29: #{sequential_compose.1} parent=5 // pred_check
        _
      $region30: #{sequential_compose.1} parent=5 // pred_check_branch
        %187 = sbr.rel (%p184) target = $region32
      $region31: #{sequential_compose.1} parent=5 // pred_region
        %s188 = ssub.s32 %s13, 1
        %s189 = sand.u32 %s64, 1
        %s190 = scalar_lea.sflag [#allocation4], %s189
        %s191 = sand.u32 %s64, 1
        %s192 = smul.addr %s191, 64
        %s193 = scalar_lea.vmem [#allocation3], %s192
        // Predicated region
        $region33: #{sequential_compose.1} parent=31 // pred_check
          %p194 = pneg %p77
        $region34: #{sequential_compose.1} parent=31 // pred_check_branch
          %196 = sbr.rel (%p194) target = $region36
        $region35: #{sequential_compose.1} parent=31 // pred_region
          %197 = dma.done %s190, 1024
        $region36: #{sequential_compose.1} parent=31 // pred_fallthru
          _
        %p198 = scmp.lt.s32.totalorder %s22, 0
        %s199 = scalar_select %p198, %s22, 0
        %s200 = smul.addr %s199, 8
        %s201 = scalar_lea.vmem %s0, %s200
        %p202 = pneg %p51
        %p203 = pneg %p48
        %s204 = sand.u32 %s64, 1
        %s205 = scalar_lea.sflag [#allocation4], %s204
        %s206 = sand.u32 %s64, 1
        %s207 = smul.addr %s206, 64
        %s208 = scalar_lea.vmem [#allocation3], %s207
        %p209 = pneg %p77
        %p210 = pneg %p74
        %p211 = scmp.lt.s32.totalorder %s23, 2
        %s212 = scalar_select %p211, %s23, 2
        %s213 = scalar_lea.vmem %s2, %s212
        %p214 = pneg %p103
        %p215 = pneg %p100
        %p216 = pneg %p129
        %p217 = pneg %p126
        %p218 = scmp.lt.s32.totalorder %s22, 0
        %s219 = scalar_select %p218, %s22, 0
        %s220 = smul.addr %s219, 8
        %s221 = scalar_lea.vmem %s0, %s220
        %p222 = scmp.lt.s32.totalorder %s23, 2
        %s223 = scalar_select %p222, %s23, 2
        %s224 = scalar_lea.vmem %s2, %s223
        %p226 = scmp.eq.s32.totalorder %s23, 0
        // Predicated region
        $region37: #{sequential_compose.1} parent=31 // pred_check
          %p227 = pneg %p226
        $region38: #{sequential_compose.1} parent=31 // pred_check_branch
          %229 = sbr.rel (%p227) target = $region40
        $region39: #{sequential_compose.1} parent=31 // pred_region
          %v230 = vld [vmem:[%s221] sm:$0xff]
          %231 = vst [vmem:[#allocation2] sm:$0xff] %v230
        $region40: #{sequential_compose.1} parent=31 // pred_fallthru
          _
        %v232 = vld [vmem:[%s193] sm:$0xf]
        %v233 = vld [vmem:[%s193 + $0x4] sm:$0xf]
        %v234 = vld [vmem:[%s193 + $0x8] sm:$0xf]
        %v235 = vld [vmem:[%s193 + $0xc] sm:$0xf]
        %v236 = vld [vmem:[%s193 + $0x10] sm:$0xf]
        %v237 = vld [vmem:[%s193 + $0x14] sm:$0xf]
        %v238 = vld [vmem:[%s193 + $0x18] sm:$0xf]
        %v239 = vld [vmem:[%s193 + $0x1c] sm:$0xf]
        %v240 = vld [vmem:[%s193 + $0x20] sm:$0xf]
        %v241 = vld [vmem:[%s193 + $0x24] sm:$0xf]
        %v242 = vld [vmem:[%s193 + $0x28] sm:$0xf]
        %v243 = vld [vmem:[%s193 + $0x2c] sm:$0xf]
        %v244 = vld [vmem:[%s193 + $0x30] sm:$0xf]
        %v245 = vld [vmem:[%s193 + $0x34] sm:$0xf]
        %v246 = vld [vmem:[%s193 + $0x38] sm:$0xf]
        %v247 = vld [vmem:[%s193 + $0x3c] sm:$0xf]
        %v248 = vld [vmem:[#allocation2] sm:$0xff]
        %v249 = vpack.c.bf16 %v248, %v248
        %v250 = vld [vmem:[%s224] sm:$0x1]
        %v252 = vlaneseq
        %v253 = vshrl.u32 %v252, 7
        %v254 = vsub.s32 0, %v253
        %v255 = vrot.slane %v250, %v254
        %v273 = vunpack.c.l.b16 %v232
        %v274 = vunpack.c.l.b16 %v233
        %v275 = vunpack.c.l.b16 %v234
        %v276 = vunpack.c.l.b16 %v235
        %v277 = vunpack.c.l.b16 %v236
        %v278 = vunpack.c.l.b16 %v237
        %v279 = vunpack.c.l.b16 %v238
        %v280 = vunpack.c.l.b16 %v239
        %v281 = vunpack.c.l.b16 %v240
        %v282 = vunpack.c.l.b16 %v241
        %v283 = vunpack.c.l.b16 %v242
        %v284 = vunpack.c.l.b16 %v243
        %v285 = vunpack.c.l.b16 %v244
        %v286 = vunpack.c.l.b16 %v245
        %v287 = vunpack.c.l.b16 %v246
        %v288 = vunpack.c.l.b16 %v247
        %v289 = vpack.c.b16 %v274, %v273
        %v290 = vpack.c.b16 %v276, %v275
        %v291 = vpack.c.b16 %v278, %v277
        %v292 = vpack.c.b16 %v280, %v279
        %v293 = vpack.c.b16 %v282, %v281
        %v294 = vpack.c.b16 %v284, %v283
        %v295 = vpack.c.b16 %v286, %v285
        %v296 = vpack.c.b16 %v288, %v287
        %305 = vmatprep.subr.bf16.mxu0 0
        %306 = vmatpush1.bf16.msra.mxu0 %v289
        %307 = vmatprep.subr.bf16.mxu0 0
        %308 = vmatpush1.bf16.msra.mxu0 %v290
        %309 = vmatprep.subr.bf16.mxu0 0
        %310 = vmatpush1.bf16.msra.mxu0 %v291
        %311 = vmatprep.subr.bf16.mxu0 0
        %312 = vmatpush1.bf16.msra.mxu0 %v292
        %313 = vmatprep.subr.bf16.mxu0 0
        %314 = vmatpush1.bf16.msra.mxu0 %v293
        %315 = vmatprep.subr.bf16.mxu0 0
        %316 = vmatpush1.bf16.msra.mxu0 %v294
        %317 = vmatprep.subr.bf16.mxu0 0
        %318 = vmatpush1.bf16.msra.mxu0 %v295
        %319 = vmatprep.subr.bf16.mxu0 0
        %320 = vmatpush1.bf16.msra.mxu0 %v296
        %321 = vmatprep.subr.bf16.mxu0 0
        %322 = vmatpush1.bf16.msra.mxu0 0
        %323 = vmatprep.subr.bf16.mxu0 0
        %324 = vmatpush1.bf16.msra.mxu0 0
        %325 = vmatprep.subr.bf16.mxu0 0
        %326 = vmatpush1.bf16.msra.mxu0 0
        %327 = vmatprep.subr.bf16.mxu0 0
        %328 = vmatpush1.bf16.msra.mxu0 0
        %329 = vmatprep.subr.bf16.mxu0 0
        %330 = vmatpush1.bf16.msra.mxu0 0
        %331 = vmatprep.subr.bf16.mxu0 0
        %332 = vmatpush1.bf16.msra.mxu0 0
        %333 = vmatprep.subr.bf16.mxu0 0
        %334 = vmatpush1.bf16.msra.mxu0 0
        %335 = vmatprep.subr.bf16.mxu0 0
        %336 = vmatpush1.bf16.msra.mxu0 0
        %337 = vmatprep.mubr.bf16.mxu0 0
        %338 = vmatmul.mubr.bf16.gmra.mrb[0].mxu0 %v249
        %v339 = vpop.f32.mrb[0].mxu0
        %v340 = vadd.f32 %v255, %v339
        %v341 = vpop.f32.mrb[0].mxu0
        %v342 = vpop.f32.mrb[0].mxu0
        %v343 = vpop.f32.mrb[0].mxu0
        %344 = vdwg.mxu0
        %v345 = vmax.f32 %v340, 0.0
        %346 = vst [vmem:[#allocation2] sm:$0xff] %v345
        %p347 = scmp.eq.s32.totalorder %s23, 2
        // Predicated region
        $region41: #{sequential_compose.1} parent=31 // pred_check
          %p348 = pneg %p347
        $region42: #{sequential_compose.1} parent=31 // pred_check_branch
          %350 = sbr.rel (%p348) target = $region44
        $region43: #{sequential_compose.1} parent=31 // pred_region
          %351 = vst [vmem:[#allocation6] sm:$0xff] %v340
        $region44: #{sequential_compose.1} parent=31 // pred_fallthru
          _
        // Predicated region
        $region45: #{sequential_compose.1} parent=31 // pred_check
          %p352 = pneg %p126
        $region46: #{sequential_compose.1} parent=31 // pred_check_branch
          %354 = sbr.rel (%p352) target = $region48
        $region47: #{sequential_compose.1} parent=31 // pred_region
          %s356 = ssub.s32 128, 128
          %357 = vsyncadd [#allocation5], %s356
          %s358 = smul.addr %s22, 128
          %s359 = scalar_lea.hbm %s3, %s358
          %s361 = sshll.u32 [#allocation6], 4
          %s362 = int_to_ptr.vmem [resolvable:$true] %s361
          %364 = dma.vmem_to_hbm [thread:$0]  %s362, 128, %s359, [#allocation5]
        $region48: #{sequential_compose.1} parent=31 // pred_fallthru
          _
        // Predicated region
        $region49: #{sequential_compose.1} parent=31 // pred_check
          %p365 = pneg %p126
        $region50: #{sequential_compose.1} parent=31 // pred_check_branch
          %367 = sbr.rel (%p365) target = $region52
        $region51: #{sequential_compose.1} parent=31 // pred_region
          %368 = dma.done [#allocation5], 128
        $region52: #{sequential_compose.1} parent=31 // pred_fallthru
          _
      $region32: #{sequential_compose.1} parent=5 // pred_fallthru
        _
      %p369 = scmp.le.s32.totalorder 2, %s13
      // Predicated region
      $region53: #{sequential_compose.1} parent=5 // pred_check
        %p370 = pneg %p369
      $region54: #{sequential_compose.1} parent=5 // pred_check_branch
        %372 = sbr.rel (%p370) target = $region56
      $region55: #{sequential_compose.1} parent=5 // pred_region
        %s373 = ssub.s32 %s13, 2
      $region56: #{sequential_compose.1} parent=5 // pred_fallthru
        _
    $region6: #{sequential_compose.1} parent=1 // loop_footer
      %s17 = sadd.s32 1, %s13
    $region7: #{sequential_compose.1} parent=1 // loop_footer_branch
      %12 = sbr.rel target = $region3
    $region8: #{sequential_compose.1} parent=1 // loop_exit
      _
    %374 = vsyncpa [#allocation4], 1
    %s375 = scalar_lea.sflag [#allocation4], 1
    %376 = vsyncpa %s375, 1
    %377 = vsyncpa [#allocation5], 1
    %s378 = scalar_lea.sflag [#allocation5], 1
    %379 = vsyncpa %s378, 1

</llo_original>
